<compile_context>
chip_gen: v6e
topology: v6e:2x2x1
jax: 0.10.0
libtpu: 0.0.40
codegen_flags: <defaults>
</compile_context>

<pallas_src>
import functools

import jax
import jax.numpy as jnp
from jax.experimental import pallas as pl
from jax.experimental.pallas import tpu as pltpu


# ----------------------------------------------------------------------------
# Kernels
# ----------------------------------------------------------------------------
def _rmsnorm_kernel(x_ref, w_ref, o_ref, *, eps, inv_h):
    """General path: x_ref (tile_rows, H), w_ref (1, H) fp32."""
    x = x_ref[...].astype(jnp.float32)                 # fp32 compute
    ss = jnp.sum(x * x, axis=-1, keepdims=True)        # XLU reduce along lanes
    inv = jax.lax.rsqrt(ss * inv_h + eps)              # EUP rsqrt; 1/H folded
    o_ref[...] = (w_ref[...] * (x * inv)).astype(o_ref.dtype)


def _rmsnorm_packed_kernel(x_ref, w_ref, m_ref, o_ref, *, eps, inv_h):
    """Lane-dense path for H < 128.

    x_ref: (tile_rows, 128) where each 128-lane row holds `pack = 128 // H`
    consecutive logical rows.  w_ref: (1, 128) fp32 weight tiled `pack` times.
    m_ref: (128, 128) fp32 block-diagonal ones matrix (1 where the two lanes
    belong to the same H-lane segment).
    """
    x = x_ref[...].astype(jnp.float32)
    # Segmented sum-of-squares on the otherwise-idle MXU: lane j of `seg`
    # receives the sum over the H-lane segment containing j, i.e. each logical
    # row's sum already broadcast across its own lanes.  Mixing is only within
    # a (packed) row, never across rows, so padded garbage rows stay isolated.
    seg = jnp.dot(x * x, m_ref[...], preferred_element_type=jnp.float32)
    inv = jax.lax.rsqrt(seg * inv_h + eps)
    o_ref[...] = (w_ref[...] * (x * inv)).astype(o_ref.dtype)


# ----------------------------------------------------------------------------
# Tiling / VMEM policy
# ----------------------------------------------------------------------------
def _vmem_budgets():
    """(tile_budget_bytes, vmem_limit_bytes), generation dependent."""
    vmem_bytes = None
    try:
        vmem_bytes = pltpu.get_tpu_info().vmem_capacity_bytes
    except Exception:
        vmem_bytes = None
    if not vmem_bytes:
        vmem_bytes = 64 * 1024 * 1024  # conservative: v7x per-TC VMEM
    # v7x (64 MiB):  limit 48 MiB, tile budget 32 MiB.
    # v5e/v6e (128 MiB): limit 96 MiB, tile budget 64 MiB.
    vmem_limit = min((vmem_bytes * 3) // 4, 100 * 1024 * 1024)
    tile_budget = (vmem_limit * 2) // 3
    return tile_budget, vmem_limit


def _pick_tile_rows(rows, lane_width, dtype, tile_budget):
    """Largest dtype-aligned row tile fitting `tile_budget`, with >= 2 grid
    steps whenever alignment allows (keeps both v7x TensorCores busy)."""
    itemsize = jnp.dtype(dtype).itemsize
    # Sublane packing alignment: 8 for f32, 16 for bf16, 32 for int8/fp8.
    align = max(8, 32 // itemsize)

    # Per-row VMEM bytes: double-buffered in + double-buffered out (native
    # dtype) plus ~2 fp32 intermediates the compiler keeps live.
    bytes_per_row = lane_width * (4 * itemsize + 8)
    tr = tile_budget // max(bytes_per_row, 1)
    tr = max(align, (tr // align) * align)

    if rows >= 2 * align:
        # Ensure at least two grid steps ("parallel" axis shards over v7x TCs).
        half = ((rows + 1) // 2 + align - 1) // align * align
        tr = min(tr, half)

    if tr >= rows:
        # Single block covering the full row extent (block == full array dim
        # satisfies the (8,128) divisibility rule even for unaligned `rows`).
        return rows
    return tr


# ----------------------------------------------------------------------------
# Wrapper
# ----------------------------------------------------------------------------
def rmsnorm(x, weight, eps=1e-6, tile_rows=None):
    """x: (..., H); weight: (H,). Returns same shape/dtype as x."""
    orig_shape = x.shape
    H = orig_shape[-1]
    x2d = x.reshape(-1, H)
    R = x2d.shape[0]

    tile_budget, vmem_limit = _vmem_budgets()
    compiler_params = pltpu.CompilerParams(
        dimension_semantics=("parallel",),
        vmem_limit_bytes=int(vmem_limit),
    )

    pack = 128 // H if (0 < H < 128 and 128 % H == 0) else 1
    use_packed = pack > 1 and (R % pack == 0)

    if use_packed:
        # ---- Lane-dense path: (R, H) -> (R/pack, 128), free in HBM ----------
        Rp = R // pack
        xp = x2d.reshape(Rp, 128)
        w_lane = jnp.tile(weight.astype(jnp.float32), pack).reshape(1, 128)
        # Block-diagonal ones matrix selecting same-segment lanes.
        row_seg = jax.lax.broadcasted_iota(jnp.int32, (128, 128), 0) // H
        col_seg = jax.lax.broadcasted_iota(jnp.int32, (128, 128), 1) // H
        seg_m = (row_seg == col_seg).astype(jnp.float32)

        tr = tile_rows if tile_rows is not None else _pick_tile_rows(
            Rp, 128, x.dtype, tile_budget)

        kernel = functools.partial(
            _rmsnorm_packed_kernel, eps=float(eps), inv_h=1.0 / H)
        out = pl.pallas_call(
            kernel,
            out_shape=jax.ShapeDtypeStruct((Rp, 128), x.dtype),
            grid_spec=pltpu.PrefetchScalarGridSpec(
                num_scalar_prefetch=0,
                grid=(pl.cdiv(Rp, tr),),          # partial last block is masked
                in_specs=[
                    pl.BlockSpec((tr, 128), lambda i: (i, 0)),
                    pl.BlockSpec((1, 128), lambda i: (0, 0)),    # weight resident
                    pl.BlockSpec((128, 128), lambda i: (0, 0)),  # seg matrix resident
                ],
                out_specs=pl.BlockSpec((tr, 128), lambda i: (i, 0)),
            ),
            compiler_params=compiler_params,
        )(xp, w_lane, seg_m)
        return out.reshape(orig_shape)

    # ---- General path (H >= 128, H not a divisor of 128, or ragged R) -------
    # TODO(synk): for H not a multiple of 128 (e.g. 576/960) the tail vreg per
    # row still uses masked stores; padding H at the model level would fix it.
    w2d = weight.astype(jnp.float32).reshape(1, H)
    tr = tile_rows if tile_rows is not None else _pick_tile_rows(
        R, H, x.dtype, tile_budget)

    kernel = functools.partial(_rmsnorm_kernel, eps=float(eps), inv_h=1.0 / H)
    out2d = pl.pallas_call(
        kernel,
        out_shape=jax.ShapeDtypeStruct((R, H), x.dtype),
        grid_spec=pltpu.PrefetchScalarGridSpec(
            num_scalar_prefetch=0,
            grid=(pl.cdiv(R, tr),),               # partial last block is masked
            in_specs=[
                pl.BlockSpec((tr, H), lambda i: (i, 0)),
                pl.BlockSpec((1, H), lambda i: (0, 0)),   # weight stays resident
            ],
            out_specs=pl.BlockSpec((tr, H), lambda i: (i, 0)),
        ),
        compiler_params=compiler_params,
    )(x2d, w2d)
    return out2d.reshape(orig_shape)


# ----------------------------------------------------------------------------
# Self-test
# ----------------------------------------------------------------------------
def _reference(x, weight, eps):
    xf = x.astype(jnp.float32)
    var = jnp.mean(xf * xf, axis=-1, keepdims=True)
    return (weight.astype(jnp.float32) * (xf * jax.lax.rsqrt(var + eps))).astype(x.dtype)


if __name__ == "__main__":
    eps = 1e-6
    key = jax.random.PRNGKey(0)
    k1, k2 = jax.random.split(key)

    # Module-consistent shape: batch=2, seq=8, hidden=32 (lane-packed path).
    batch, seq, hidden = 2, 8, 32
    x = jax.random.normal(k1, (batch, seq, hidden), dtype=jnp.float32).astype(
        jnp.bfloat16)
    weight = jnp.ones((hidden,), dtype=jnp.float32)  # nn.Parameter(torch.ones(H))

    out = jax.block_until_ready(rmsnorm(x, weight, eps=eps))
    ref = _reference(x, weight, eps)
    assert out.shape == x.shape and out.dtype == x.dtype
    assert jnp.allclose(out.astype(jnp.float32), ref.astype(jnp.float32),
                        atol=1e-2, rtol=1e-2)

    # Exercise the general (unpacked) path too: H > 128, not a multiple of 128.
    hidden2 = 192
    x2 = jax.random.normal(k2, (batch, seq, hidden2), dtype=jnp.float32).astype(
        jnp.bfloat16)
    weight2 = jnp.ones((hidden2,), dtype=jnp.float32)
    out2 = jax.block_until_ready(rmsnorm(x2, weight2, eps=eps))
    ref2 = _reference(x2, weight2, eps)
    assert out2.shape == x2.shape and out2.dtype == x2.dtype
    assert jnp.allclose(out2.astype(jnp.float32), ref2.astype(jnp.float32),
                        atol=1e-2, rtol=1e-2)

    print("KERNEL_OK")
</pallas_src>

<mosaic_0001>
module attributes {stable_mosaic.version = 11 : i64} {
  func.func @_rmsnorm_packed_kernel(%arg0: i32, %arg1: memref<4x128xbf16, #tpu.memory_space<vmem>>, %arg2: memref<1x128xf32, #tpu.memory_space<vmem>>, %arg3: memref<128x128xf32, #tpu.memory_space<vmem>>, %arg4: memref<4x128xbf16, #tpu.memory_space<vmem>>) attributes {dimension_semantics = [#tpu.dimension_semantics<parallel>], iteration_bounds = array<i64: 1>, scalar_prefetch = 0 : i64, scratch_operands = 0 : i64, tpu.core_type = #tpu.core_type<tc>, window_params = [{transform_indices = @transform_0, window_bounds = array<i64: 4, 128>}, {pipeline_mode = #tpu.pipeline_mode<synchronous>, transform_indices = @transform_1, window_bounds = array<i64: 1, 128>}, {pipeline_mode = #tpu.pipeline_mode<synchronous>, transform_indices = @transform_2, window_bounds = array<i64: 128, 128>}, {transform_indices = @transform_3, window_bounds = array<i64: 4, 128>}]} {
    %c0 = arith.constant 0 : index
    %c0_0 = arith.constant 0 : index
    %0 = vector.load %arg1[%c0, %c0_0] : memref<4x128xbf16, #tpu.memory_space<vmem>>, vector<4x128xbf16>
    %1 = arith.extf %0 : vector<4x128xbf16> to vector<4x128xf32>
    %2 = arith.mulf %1, %1 : vector<4x128xf32>
    %c0_1 = arith.constant 0 : index
    %c0_2 = arith.constant 0 : index
    %3 = vector.load %arg3[%c0_1, %c0_2] : memref<128x128xf32, #tpu.memory_space<vmem>>, vector<128x128xf32>
    %cst = arith.constant dense<0.000000e+00> : vector<4x128xf32>
    %4 = tpu.matmul %2, %3, %cst {dimension_numbers = #tpu.dot_dimension_numbers<[1], [0], [0], [1], [0, 0, 1, 1], [], []>} : vector<4x128xf32>, vector<128x128xf32>, vector<4x128xf32> -> vector<4x128xf32>
    %cst_3 = arith.constant 3.125000e-02 : f32
    %5 = vector.broadcast %cst_3 : f32 to vector<4x128xf32>
    %6 = arith.mulf %4, %5 : vector<4x128xf32>
    %cst_4 = arith.constant 9.99999997E-7 : f32
    %7 = vector.broadcast %cst_4 : f32 to vector<4x128xf32>
    %8 = arith.addf %6, %7 : vector<4x128xf32>
    %9 = math.rsqrt %8 : vector<4x128xf32>
    %c0_5 = arith.constant 0 : index
    %c0_6 = arith.constant 0 : index
    %10 = vector.load %arg2[%c0_5, %c0_6] : memref<1x128xf32, #tpu.memory_space<vmem>>, vector<1x128xf32>
    %11 = arith.mulf %1, %9 : vector<4x128xf32>
    %12 = vector.broadcast %10 : vector<1x128xf32> to vector<4x128xf32>
    %13 = arith.mulf %12, %11 : vector<4x128xf32>
    %14 = arith.truncf %13 : vector<4x128xf32> to vector<4x128xbf16>
    %c0_7 = arith.constant 0 : index
    %c0_8 = arith.constant 0 : index
    %15 = vector.load %arg4[%c0_7, %c0_8] : memref<4x128xbf16, #tpu.memory_space<vmem>>, vector<4x128xbf16>
    tpu.vector_store %arg4[%c0_7, %c0_8], %14 {strides = array<i32>} : memref<4x128xbf16, #tpu.memory_space<vmem>>, vector<4x128xbf16>,
    return
  }
  func.func @transform_0(%arg0: i32) -> (i32, i32) {
    %c0_i32 = arith.constant 0 : i32
    %c0_i32_0 = arith.constant 0 : i32
    return %arg0, %c0_i32 : i32, i32
  }
  func.func @transform_1(%arg0: i32) -> (i32, i32) {
    %c0_i32 = arith.constant 0 : i32
    %c0_i32_0 = arith.constant 0 : i32
    %c0_i32_1 = arith.constant 0 : i32
    return %c0_i32, %c0_i32_0 : i32, i32
  }
  func.func @transform_2(%arg0: i32) -> (i32, i32) {
    %c0_i32 = arith.constant 0 : i32
    %c0_i32_0 = arith.constant 0 : i32
    %c0_i32_1 = arith.constant 0 : i32
    return %c0_i32, %c0_i32_0 : i32, i32
  }
  func.func @transform_3(%arg0: i32) -> (i32, i32) {
    %c0_i32 = arith.constant 0 : i32
    %c0_i32_0 = arith.constant 0 : i32
    return %arg0, %c0_i32 : i32, i32
  }
}

</mosaic_0001>

<llo_original>
// kernel: tpu_custom_call.1
$region0: #{tpu_custom_call.1}
  #allocation0 [shape = 'u32[]', space=smem, size = 0x4, offset = 0x4, fixed_abs, tag = 'smem constant byte address 0x4 - core index']
  #allocation1 [shape = 'u32[144,128]{1,0:T(1,128)}', space=vmem, size = 0x12000, scoped, tag = 'internal scratch']
  %s0 = inlined_call_operand.hbm [shape: bf16[4,128], index: 0, kind: input, shape index: {}]
  %s1 = inlined_call_operand.vmem [shape: f32[1,128], index: 1, kind: input, shape index: {}]
  %s2 = inlined_call_operand.hbm [shape: f32[128,128], index: 2, kind: input, shape index: {}]
  %s3 = inlined_call_operand.hbm [shape: bf16[4,128], index: 3, kind: output, shape index: {}]
  %s4 = sld [smem:[#allocation0]]
  $region30: #{tpu_custom_call.1} parent=0
    _
  %s6 = ssub.s32 1, %s4
  %s7 = scalar_select 0, %s6, %s4
  $region1: #{tpu_custom_call.1} parent=0
    #allocation2 [shape = 'u8[1024]{0}', space=vmem, size = 0x400, scoped, tag = 'input window, operand 0, single buffered']
    #allocation3 [shape = 's32[1]{0}', space=sflag, size = 0x4, scoped, tag = 'scoped memory for tpu_custom_call.1']
    #allocation4 [shape = 's32[1]{0}', space=sflag, size = 0x4, scoped, tag = 'scoped memory for tpu_custom_call.1']
    #allocation5 [shape = 'u8[65536]{0}', space=vmem, size = 0x10000, scoped, tag = 'input window, operand 2, single buffered']
    #allocation6 [shape = 's32[1]{0}', space=sflag, size = 0x4, scoped, tag = 'scoped memory for tpu_custom_call.1']
    #allocation7 [shape = 'u8[1024]{0}', space=vmem, size = 0x400, scoped, tag = 'output window, operand 0, single buffered']
    %8 = vsyncpa [#allocation3], 0
    %9 = vsyncpa [#allocation6], 0
    %10 = vsyncpa [#allocation4], 0
    // Predicated region
    $region2: #{tpu_custom_call.1} parent=1 // pred_check
      _
    $region3: #{tpu_custom_call.1} parent=1 // pred_check_branch
      %12 = sbr.rel (0) target = $region5
    $region4: #{tpu_custom_call.1} parent=1 // pred_region
      %s14 = ssub.s32 32, 32
      %15 = vsyncadd [#allocation3], %s14
      %s17 = sshll.u32 [#allocation2], 4
      %s18 = int_to_ptr.vmem [resolvable:$true] %s17
      %20 = dma.hbm_to_vmem [thread:$0]  %s0, 32, %s18, [#allocation3]
    $region5: #{tpu_custom_call.1} parent=1 // pred_fallthru
      _
    // Predicated region
    $region6: #{tpu_custom_call.1} parent=1 // pred_check
      _
    $region7: #{tpu_custom_call.1} parent=1 // pred_check_branch
      %22 = sbr.rel (0) target = $region9
    $region8: #{tpu_custom_call.1} parent=1 // pred_region
      _
    $region9: #{tpu_custom_call.1} parent=1 // pred_fallthru
      _
    // Predicated region
    $region10: #{tpu_custom_call.1} parent=1 // pred_check
      _
    $region11: #{tpu_custom_call.1} parent=1 // pred_check_branch
      %24 = sbr.rel (0) target = $region13
    $region12: #{tpu_custom_call.1} parent=1 // pred_region
      %s26 = ssub.s32 2048, 2048
      %27 = vsyncadd [#allocation6], %s26
      %s28 = sshll.u32 [#allocation5], 4
      %s29 = int_to_ptr.vmem [resolvable:$true] %s28
      %34 = dma.hbm_to_vmem [thread:$0]  %s2, 2048, %s29, [#allocation6], 128, 128, 8
    $region13: #{tpu_custom_call.1} parent=1 // pred_fallthru
      _
    // Predicated region
    $region14: #{tpu_custom_call.1} parent=1 // pred_check
      _
    $region15: #{tpu_custom_call.1} parent=1 // pred_check_branch
      %36 = sbr.rel (0) target = $region17
    $region16: #{tpu_custom_call.1} parent=1 // pred_region
      %37 = dma.done [#allocation3], 32
    $region17: #{tpu_custom_call.1} parent=1 // pred_fallthru
      _
    // Predicated region
    $region18: #{tpu_custom_call.1} parent=1 // pred_check
      _
    $region19: #{tpu_custom_call.1} parent=1 // pred_check_branch
      %39 = sbr.rel (0) target = $region21
    $region20: #{tpu_custom_call.1} parent=1 // pred_region
      %40 = dma.done [#allocation6], 2048
    $region21: #{tpu_custom_call.1} parent=1 // pred_fallthru
      _
    %v41 = vld [vmem:[#allocation2] sm:$0x3]
    %v42 = vunpack.c.l.bf16 %v41
    %v43 = vmul.f32 %v42, %v42
    %v44 = vld [vmem:[#allocation5] sm:$0xff]
    %v45 = vld [vmem:[#allocation5 + $0x8] sm:$0xff]
    %v46 = vld [vmem:[#allocation5 + $0x10] sm:$0xff]
    %v47 = vld [vmem:[#allocation5 + $0x18] sm:$0xff]
    %v48 = vld [vmem:[#allocation5 + $0x20] sm:$0xff]
    %v49 = vld [vmem:[#allocation5 + $0x28] sm:$0xff]
    %v50 = vld [vmem:[#allocation5 + $0x30] sm:$0xff]
    %v51 = vld [vmem:[#allocation5 + $0x38] sm:$0xff]
    %v52 = vld [vmem:[#allocation5 + $0x40] sm:$0xff]
    %v53 = vld [vmem:[#allocation5 + $0x48] sm:$0xff]
    %v54 = vld [vmem:[#allocation5 + $0x50] sm:$0xff]
    %v55 = vld [vmem:[#allocation5 + $0x58] sm:$0xff]
    %v56 = vld [vmem:[#allocation5 + $0x60] sm:$0xff]
    %v57 = vld [vmem:[#allocation5 + $0x68] sm:$0xff]
    %v58 = vld [vmem:[#allocation5 + $0x70] sm:$0xff]
    %v59 = vld [vmem:[#allocation5 + $0x78] sm:$0xff]
    %60 = vmatprep.subr.mxu0 0.0
    %61 = vmatpush1.msra.mxu0 %v59
    %62 = vmatprep.subr.mxu0 0.0
    %63 = vmatpush1.msra.mxu0 %v58
    %64 = vmatprep.subr.mxu0 0.0
    %65 = vmatpush1.msra.mxu0 %v57
    %66 = vmatprep.subr.mxu0 0.0
    %67 = vmatpush1.msra.mxu0 %v56
    %68 = vmatprep.subr.mxu0 0.0
    %69 = vmatpush1.msra.mxu0 %v55
    %70 = vmatprep.subr.mxu0 0.0
    %71 = vmatpush1.msra.mxu0 %v54
    %72 = vmatprep.subr.mxu0 0.0
    %73 = vmatpush1.msra.mxu0 %v53
    %74 = vmatprep.subr.mxu0 0.0
    %75 = vmatpush1.msra.mxu0 %v52
    %76 = vmatprep.subr.mxu0 0.0
    %77 = vmatpush1.msra.mxu0 %v51
    %78 = vmatprep.subr.mxu0 0.0
    %79 = vmatpush1.msra.mxu0 %v50
    %80 = vmatprep.subr.mxu0 0.0
    %81 = vmatpush1.msra.mxu0 %v49
    %82 = vmatprep.subr.mxu0 0.0
    %83 = vmatpush1.msra.mxu0 %v48
    %84 = vmatprep.subr.mxu0 0.0
    %85 = vmatpush1.msra.mxu0 %v47
    %86 = vmatprep.subr.mxu0 0.0
    %87 = vmatpush1.msra.mxu0 %v46
    %88 = vmatprep.subr.mxu0 0.0
    %89 = vmatpush1.msra.mxu0 %v45
    %90 = vmatprep.subr.mxu0 0.0
    %91 = vmatpush1.msra.mxu0 %v44
    %92 = vmatprep.subr.mxu0 0.0
    %93 = vmatpush2.msra.mxu0 0.0
    %94 = vmatprep.subr.mxu0 0.0
    %95 = vmatpush2.msra.mxu0 0.0
    %96 = vmatprep.subr.mxu0 0.0
    %97 = vmatpush2.msra.mxu0 0.0
    %98 = vmatprep.subr.mxu0 0.0
    %99 = vmatpush2.msra.mxu0 0.0
    %100 = vmatprep.subr.mxu0 0.0
    %101 = vmatpush2.msra.mxu0 0.0
    %102 = vmatprep.subr.mxu0 0.0
    %103 = vmatpush2.msra.mxu0 0.0
    %104 = vmatprep.subr.mxu0 0.0
    %105 = vmatpush2.msra.mxu0 0.0
    %106 = vmatprep.subr.mxu0 0.0
    %107 = vmatpush2.msra.mxu0 0.0
    %108 = vmatprep.subr.mxu0 0.0
    %109 = vmatpush2.msra.mxu0 0.0
    %110 = vmatprep.subr.mxu0 0.0
    %111 = vmatpush2.msra.mxu0 0.0
    %112 = vmatprep.subr.mxu0 0.0
    %113 = vmatpush2.msra.mxu0 0.0
    %114 = vmatprep.subr.mxu0 0.0
    %115 = vmatpush2.msra.mxu0 0.0
    %116 = vmatprep.subr.mxu0 0.0
    %117 = vmatpush2.msra.mxu0 0.0
    %118 = vmatprep.subr.mxu0 0.0
    %119 = vmatpush2.msra.mxu0 0.0
    %120 = vmatprep.subr.mxu0 0.0
    %121 = vmatpush2.msra.mxu0 0.0
    %122 = vmatprep.subr.mxu0 0.0
    %123 = vmatpush2.msra.mxu0 0.0
    %124 = vmatprep.mubr.f32.mxu0 0.0
    %125 = vmatmul.mubr.f32.gmra.mxu0 %v43
    %v126 = vpop.f32.mrf.mxu0
    %v127 = vadd.f32 0.0, %v126
    %v128 = vpop.f32.mrf.mxu0
    %129 = vdwg.mxu0
    %v130 = vmul.f32 %v127, 0.03125
    %v131 = vadd.f32 %v130, 1e-06
    %v132 = vrsqrt.pop %v131
    %v133 = vld [vmem:[%s1] sm:$0x1]
    %v134 = vmul.f32 %v42, %v132
    %v136 = vlaneseq
    %v137 = vshrl.u32 %v136, 7
    %v138 = vsub.s32 0, %v137
    %v139 = vrot.slane %v133, %v138
    %v141 = vmul.f32 %v139, %v134
    %v142 = vpack.c.bf16 %v141, %v141
    %143 = vst [vmem:[#allocation7] sm:$0x3] %v142
    // Predicated region
    $region22: #{tpu_custom_call.1} parent=1 // pred_check
      _
    $region23: #{tpu_custom_call.1} parent=1 // pred_check_branch
      %145 = sbr.rel (0) target = $region25
    $region24: #{tpu_custom_call.1} parent=1 // pred_region
      %s147 = ssub.s32 32, 32
      %148 = vsyncadd [#allocation4], %s147
      %s150 = sshll.u32 [#allocation7], 4
      %s151 = int_to_ptr.vmem [resolvable:$true] %s150
      %153 = dma.vmem_to_hbm [thread:$0]  %s151, 32, %s3, [#allocation4]
    $region25: #{tpu_custom_call.1} parent=1 // pred_fallthru
      _
    // Predicated region
    $region26: #{tpu_custom_call.1} parent=1 // pred_check
      _
    $region27: #{tpu_custom_call.1} parent=1 // pred_check_branch
      %155 = sbr.rel (0) target = $region29
    $region28: #{tpu_custom_call.1} parent=1 // pred_region
      %156 = dma.done [#allocation4], 32
    $region29: #{tpu_custom_call.1} parent=1 // pred_fallthru
      _
    %157 = vsyncpa [#allocation3], 1
    %158 = vsyncpa [#allocation6], 1
    %159 = vsyncpa [#allocation4], 1

</llo_original>
